<compile_context>
chip_gen: v6e
topology: v6e:2x2x1
jax: 0.10.0
libtpu: 0.0.40
codegen_flags: <defaults>
</compile_context>

<pallas_src>
import functools

import jax
import jax.numpy as jnp
from jax import lax
from jax.experimental import pallas as pl
from jax.experimental.pallas import tpu as pltpu

_LANES = 128                       # vreg lane width
_CHUNK_ROWS = 32                   # rows per inner chunk (4 f32 vregs / channel)
_MAX_ROW_TILE = 4096               # hard cap on spatial rows per pipelined block
_VMEM_BUDGET = 24 * 1024 * 1024    # target double-buffered in+out working set
_VMEM_LIMIT = 40 * 1024 * 1024     # scoped VMEM limit (v7x physical is 64 MiB)


def _round_up(x, m):
    return (x + m - 1) // m * m


def _pick_row_tile(rows, lanes, cin, cout, itemsize):
    """Biggest row tile whose double-buffered in+out blocks fit the budget."""
    lanes_pad = _round_up(lanes, _LANES)            # VMEM pads lanes to 128
    per_row = 2 * (cin + cout) * lanes_pad * itemsize
    t = max(_VMEM_BUDGET // per_row, 8)
    t = min(t, _MAX_ROW_TILE)
    if t >= rows:
        return rows                                  # full extent -> single tile
    t = (t // _CHUNK_ROWS) * _CHUNK_ROWS             # multiple of the chunk size
    return int(max(t, 8))                            # (8 keeps sublane alignment)


def _torgb_kernel(w_ref, b_ref, x_ref, o_ref, *, cin, cout, row_tile, chunk_rows):
    # w_ref: SMEM (cin*cout,) with W[ci, co] at index ci*cout + co
    # b_ref: SMEM (cout,)
    # x_ref: VMEM (1, cin,  row_tile, lanes)
    # o_ref: VMEM (1, cout, row_tile, lanes)
    w = [[w_ref[ci * cout + co] for co in range(cout)] for ci in range(cin)]
    b = [b_ref[co] for co in range(cout)]

    def do_chunk(r0, rn):
        rs = pl.ds(r0, rn)
        accs = [None] * cout
        for ci in range(cin):                # each input chunk loaded exactly once
            xv = x_ref[0, ci, rs, :]
            for co in range(cout):
                p = xv * w[ci][co]
                accs[co] = p if accs[co] is None else accs[co] + p
        for co in range(cout):
            o_ref[0, co, rs, :] = jnp.tanh(accs[co] + b[co]).astype(o_ref.dtype)

    n_full = row_tile // chunk_rows
    rem = row_tile - n_full * chunk_rows
    if n_full > 0:
        if n_full <= 16:
            # Short fixed trip-count: keep it static (full LLO visibility).
            for j in range(n_full):
                do_chunk(j * chunk_rows, chunk_rows)
        else:
            # Many chunks: bound code size / live ranges with a fori_loop.
            def body(i, carry):
                do_chunk(pl.multiple_of(i * chunk_rows, chunk_rows), chunk_rows)
                return carry
            lax.fori_loop(0, n_full, body, 0, unroll=4)
    if rem > 0:
        do_chunk(n_full * chunk_rows, rem)


def to_rgb_forward(x_nchw, weight, bias):
    """ToRGB forward.

    x_nchw: (N, Cin, H, W)
    weight: (Cin, Cout)   (ConvTranspose2d weight (Cin, Cout, 1, 1) squeezed)
    bias:   (Cout,)
    returns (N, Cout, H, W)
    """
    N, Cin, H, W = x_nchw.shape
    Cout = weight.shape[1]
    hw = H * W
    itemsize = jnp.dtype(x_nchw.dtype).itemsize

    # Lane-dense view of the spatial axis with NO padding copy.
    if hw % _LANES == 0:
        rows, lanes = hw // _LANES, _LANES
        x4 = x_nchw.reshape(N, Cin, rows, lanes)      # contiguous -> free
    else:
        rows, lanes = H, W                            # ragged: keep NCHW as-is
        x4 = x_nchw

    row_tile = _pick_row_tile(rows, lanes, Cin, Cout, itemsize)
    grid_t = pl.cdiv(rows, row_tile)                  # masked edge block if ragged
    chunk_rows = min(_CHUNK_ROWS, row_tile)

    # Scalar prefetch reads 32-bit SMEM scalars -> force f32 params.
    w_flat = weight.reshape(-1).astype(jnp.float32)
    b_flat = bias.astype(jnp.float32)

    kernel = functools.partial(
        _torgb_kernel, cin=Cin, cout=Cout, row_tile=row_tile, chunk_rows=chunk_rows)

    cost = pl.CostEstimate(
        flops=2 * N * Cin * Cout * hw,
        transcendentals=N * Cout * hw,
        bytes_accessed=N * (Cin + Cout) * hw * itemsize,
    )

    out4 = pl.pallas_call(
        kernel,
        out_shape=jax.ShapeDtypeStruct((N, Cout, rows, lanes), x_nchw.dtype),
        grid_spec=pltpu.PrefetchScalarGridSpec(
            num_scalar_prefetch=2,                    # weight + bias -> SMEM
            grid=(N, grid_t),
            in_specs=[
                pl.BlockSpec((1, Cin, row_tile, lanes),
                             lambda n, t, w, b: (n, 0, t, 0)),
            ],
            out_specs=pl.BlockSpec((1, Cout, row_tile, lanes),
                                   lambda n, t, w, b: (n, 0, t, 0)),
        ),
        compiler_params=pltpu.CompilerParams(
            dimension_semantics=("parallel", "parallel"),
            vmem_limit_bytes=_VMEM_LIMIT,
        ),
        cost_estimate=cost,
    )(w_flat, b_flat, x4)

    return out4.reshape(N, Cout, H, W)                # contiguous -> free


if __name__ == "__main__":
    key = jax.random.PRNGKey(0)
    k_x, k_w, k_b = jax.random.split(key, 3)

    N, Cin, Cout, H, W = 2, 4, 3, 16, 16

    # ConvTranspose2d weight ~ N(0, 0.02), shape (Cin, Cout, 1, 1) -> (Cin, Cout)
    weight = (0.02 * jax.random.normal(k_w, (Cin, Cout))).astype(jnp.float32)
    bias = (0.02 * jax.random.normal(k_b, (Cout,))).astype(jnp.float32)
    x = jax.random.normal(k_x, (N, Cin, H, W), dtype=jnp.float32)

    run = jax.jit(to_rgb_forward)
    out = jax.block_until_ready(run(x, weight, bias))

    # Pure-JAX f32 reference (elementwise mul + reduce, avoids MXU precision).
    ref = jnp.tanh(
        jnp.sum(x[:, :, None, :, :] * weight[None, :, :, None, None], axis=1)
        + bias[None, :, None, None]
    )
    assert out.shape == (N, Cout, H, W)
    assert jnp.allclose(out, ref, atol=1e-5, rtol=1e-5)

    print("KERNEL_OK")
</pallas_src>

<mosaic_0001>
module attributes {stable_mosaic.version = 11 : i64} {
  func.func @_torgb_kernel(%arg0: i32, %arg1: i32, %arg2: memref<12xf32, #tpu.memory_space<smem>>, %arg3: memref<3xf32, #tpu.memory_space<smem>>, %arg4: memref<1x4x2x128xf32, #tpu.memory_space<vmem>>, %arg5: memref<1x3x2x128xf32, #tpu.memory_space<vmem>>) attributes {dimension_semantics = [#tpu.dimension_semantics<parallel>, #tpu.dimension_semantics<parallel>], iteration_bounds = array<i64: 2, 1>, scalar_prefetch = 2 : i64, scratch_operands = 0 : i64, tpu.core_type = #tpu.core_type<tc>, window_params = [{transform_indices = @transform_0, window_bounds = array<i64: 1, 4, 2, 128>}, {transform_indices = @transform_1, window_bounds = array<i64: 1, 3, 2, 128>}]} {
    %c0 = arith.constant 0 : index
    %0 = memref.load %arg2[%c0] : memref<12xf32, #tpu.memory_space<smem>>
    %c1 = arith.constant 1 : index
    %1 = memref.load %arg2[%c1] : memref<12xf32, #tpu.memory_space<smem>>
    %c2 = arith.constant 2 : index
    %2 = memref.load %arg2[%c2] : memref<12xf32, #tpu.memory_space<smem>>
    %c3 = arith.constant 3 : index
    %3 = memref.load %arg2[%c3] : memref<12xf32, #tpu.memory_space<smem>>
    %c4 = arith.constant 4 : index
    %4 = memref.load %arg2[%c4] : memref<12xf32, #tpu.memory_space<smem>>
    %c5 = arith.constant 5 : index
    %5 = memref.load %arg2[%c5] : memref<12xf32, #tpu.memory_space<smem>>
    %c6 = arith.constant 6 : index
    %6 = memref.load %arg2[%c6] : memref<12xf32, #tpu.memory_space<smem>>
    %c7 = arith.constant 7 : index
    %7 = memref.load %arg2[%c7] : memref<12xf32, #tpu.memory_space<smem>>
    %c8 = arith.constant 8 : index
    %8 = memref.load %arg2[%c8] : memref<12xf32, #tpu.memory_space<smem>>
    %c9 = arith.constant 9 : index
    %9 = memref.load %arg2[%c9] : memref<12xf32, #tpu.memory_space<smem>>
    %c10 = arith.constant 10 : index
    %10 = memref.load %arg2[%c10] : memref<12xf32, #tpu.memory_space<smem>>
    %c11 = arith.constant 11 : index
    %11 = memref.load %arg2[%c11] : memref<12xf32, #tpu.memory_space<smem>>
    %c0_0 = arith.constant 0 : index
    %12 = memref.load %arg3[%c0_0] : memref<3xf32, #tpu.memory_space<smem>>
    %c1_1 = arith.constant 1 : index
    %13 = memref.load %arg3[%c1_1] : memref<3xf32, #tpu.memory_space<smem>>
    %c2_2 = arith.constant 2 : index
    %14 = memref.load %arg3[%c2_2] : memref<3xf32, #tpu.memory_space<smem>>
    %c0_3 = arith.constant 0 : index
    %c0_4 = arith.constant 0 : index
    %c0_5 = arith.constant 0 : index
    %c0_6 = arith.constant 0 : index
    %15 = vector.load %arg4[%c0_3, %c0_4, %c0_5, %c0_6] : memref<1x4x2x128xf32, #tpu.memory_space<vmem>>, vector<1x1x2x128xf32>
    %16 = vector.shape_cast %15 : vector<1x1x2x128xf32> to vector<2x128xf32>
    %17 = vector.broadcast %0 : f32 to vector<2x128xf32>
    %18 = arith.mulf %16, %17 : vector<2x128xf32>
    %19 = vector.broadcast %1 : f32 to vector<2x128xf32>
    %20 = arith.mulf %16, %19 : vector<2x128xf32>
    %21 = vector.broadcast %2 : f32 to vector<2x128xf32>
    %22 = arith.mulf %16, %21 : vector<2x128xf32>
    %c0_7 = arith.constant 0 : index
    %c1_8 = arith.constant 1 : index
    %c0_9 = arith.constant 0 : index
    %c0_10 = arith.constant 0 : index
    %23 = vector.load %arg4[%c0_7, %c1_8, %c0_9, %c0_10] : memref<1x4x2x128xf32, #tpu.memory_space<vmem>>, vector<1x1x2x128xf32>
    %24 = vector.shape_cast %23 : vector<1x1x2x128xf32> to vector<2x128xf32>
    %25 = vector.broadcast %3 : f32 to vector<2x128xf32>
    %26 = arith.mulf %24, %25 : vector<2x128xf32>
    %27 = arith.addf %18, %26 : vector<2x128xf32>
    %28 = vector.broadcast %4 : f32 to vector<2x128xf32>
    %29 = arith.mulf %24, %28 : vector<2x128xf32>
    %30 = arith.addf %20, %29 : vector<2x128xf32>
    %31 = vector.broadcast %5 : f32 to vector<2x128xf32>
    %32 = arith.mulf %24, %31 : vector<2x128xf32>
    %33 = arith.addf %22, %32 : vector<2x128xf32>
    %c0_11 = arith.constant 0 : index
    %c2_12 = arith.constant 2 : index
    %c0_13 = arith.constant 0 : index
    %c0_14 = arith.constant 0 : index
    %34 = vector.load %arg4[%c0_11, %c2_12, %c0_13, %c0_14] : memref<1x4x2x128xf32, #tpu.memory_space<vmem>>, vector<1x1x2x128xf32>
    %35 = vector.shape_cast %34 : vector<1x1x2x128xf32> to vector<2x128xf32>
    %36 = vector.broadcast %6 : f32 to vector<2x128xf32>
    %37 = arith.mulf %35, %36 : vector<2x128xf32>
    %38 = arith.addf %27, %37 : vector<2x128xf32>
    %39 = vector.broadcast %7 : f32 to vector<2x128xf32>
    %40 = arith.mulf %35, %39 : vector<2x128xf32>
    %41 = arith.addf %30, %40 : vector<2x128xf32>
    %42 = vector.broadcast %8 : f32 to vector<2x128xf32>
    %43 = arith.mulf %35, %42 : vector<2x128xf32>
    %44 = arith.addf %33, %43 : vector<2x128xf32>
    %c0_15 = arith.constant 0 : index
    %c3_16 = arith.constant 3 : index
    %c0_17 = arith.constant 0 : index
    %c0_18 = arith.constant 0 : index
    %45 = vector.load %arg4[%c0_15, %c3_16, %c0_17, %c0_18] : memref<1x4x2x128xf32, #tpu.memory_space<vmem>>, vector<1x1x2x128xf32>
    %46 = vector.shape_cast %45 : vector<1x1x2x128xf32> to vector<2x128xf32>
    %47 = vector.broadcast %9 : f32 to vector<2x128xf32>
    %48 = arith.mulf %46, %47 : vector<2x128xf32>
    %49 = arith.addf %38, %48 : vector<2x128xf32>
    %50 = vector.broadcast %10 : f32 to vector<2x128xf32>
    %51 = arith.mulf %46, %50 : vector<2x128xf32>
    %52 = arith.addf %41, %51 : vector<2x128xf32>
    %53 = vector.broadcast %11 : f32 to vector<2x128xf32>
    %54 = arith.mulf %46, %53 : vector<2x128xf32>
    %55 = arith.addf %44, %54 : vector<2x128xf32>
    %56 = vector.broadcast %12 : f32 to vector<2x128xf32>
    %57 = arith.addf %49, %56 : vector<2x128xf32>
    %58 = math.tanh %57 : vector<2x128xf32>
    %c0_19 = arith.constant 0 : index
    %c0_20 = arith.constant 0 : index
    %c0_21 = arith.constant 0 : index
    %c0_22 = arith.constant 0 : index
    %59 = vector.load %arg5[%c0_19, %c0_20, %c0_21, %c0_22] : memref<1x3x2x128xf32, #tpu.memory_space<vmem>>, vector<1x1x2x128xf32>
    %60 = vector.shape_cast %59 : vector<1x1x2x128xf32> to vector<2x128xf32>
    %61 = vector.shape_cast %58 : vector<2x128xf32> to vector<1x1x2x128xf32>
    tpu.vector_store %arg5[%c0_19, %c0_20, %c0_21, %c0_22], %61 {strides = array<i32>} : memref<1x3x2x128xf32, #tpu.memory_space<vmem>>, vector<1x1x2x128xf32>,
    %62 = vector.broadcast %13 : f32 to vector<2x128xf32>
    %63 = arith.addf %52, %62 : vector<2x128xf32>
    %64 = math.tanh %63 : vector<2x128xf32>
    %c0_23 = arith.constant 0 : index
    %c1_24 = arith.constant 1 : index
    %c0_25 = arith.constant 0 : index
    %c0_26 = arith.constant 0 : index
    %65 = vector.load %arg5[%c0_23, %c1_24, %c0_25, %c0_26] : memref<1x3x2x128xf32, #tpu.memory_space<vmem>>, vector<1x1x2x128xf32>
    %66 = vector.shape_cast %65 : vector<1x1x2x128xf32> to vector<2x128xf32>
    %67 = vector.shape_cast %64 : vector<2x128xf32> to vector<1x1x2x128xf32>
    tpu.vector_store %arg5[%c0_23, %c1_24, %c0_25, %c0_26], %67 {strides = array<i32>} : memref<1x3x2x128xf32, #tpu.memory_space<vmem>>, vector<1x1x2x128xf32>,
    %68 = vector.broadcast %14 : f32 to vector<2x128xf32>
    %69 = arith.addf %55, %68 : vector<2x128xf32>
    %70 = math.tanh %69 : vector<2x128xf32>
    %c0_27 = arith.constant 0 : index
    %c2_28 = arith.constant 2 : index
    %c0_29 = arith.constant 0 : index
    %c0_30 = arith.constant 0 : index
    %71 = vector.load %arg5[%c0_27, %c2_28, %c0_29, %c0_30] : memref<1x3x2x128xf32, #tpu.memory_space<vmem>>, vector<1x1x2x128xf32>
    %72 = vector.shape_cast %71 : vector<1x1x2x128xf32> to vector<2x128xf32>
    %73 = vector.shape_cast %70 : vector<2x128xf32> to vector<1x1x2x128xf32>
    tpu.vector_store %arg5[%c0_27, %c2_28, %c0_29, %c0_30], %73 {strides = array<i32>} : memref<1x3x2x128xf32, #tpu.memory_space<vmem>>, vector<1x1x2x128xf32>,
    return
  }
  func.func @transform_0(%arg0: i32, %arg1: i32, %arg2: memref<12xf32, #tpu.memory_space<smem>>, %arg3: memref<3xf32, #tpu.memory_space<smem>>) -> (i32, i32, i32, i32) {
    %c0_i32 = arith.constant 0 : i32
    %c0_i32_0 = arith.constant 0 : i32
    %c0_i32_1 = arith.constant 0 : i32
    return %arg0, %c0_i32, %arg1, %c0_i32_0 : i32, i32, i32, i32
  }
  func.func @transform_1(%arg0: i32, %arg1: i32, %arg2: memref<12xf32, #tpu.memory_space<smem>>, %arg3: memref<3xf32, #tpu.memory_space<smem>>) -> (i32, i32, i32, i32) {
    %c0_i32 = arith.constant 0 : i32
    %c0_i32_0 = arith.constant 0 : i32
    %c0_i32_1 = arith.constant 0 : i32
    return %arg0, %c0_i32, %arg1, %c0_i32_0 : i32, i32, i32, i32
  }
}

</mosaic_0001>

<llo_original>
// kernel: to_rgb_forward.1
$region0: #{to_rgb_forward.1}
  #allocation0 [shape = 'u32[]', space=smem, size = 0x4, offset = 0x4, fixed_abs, tag = 'smem constant byte address 0x4 - core index']
  #allocation1 [shape = 'u32[144,128]{1,0:T(1,128)}', space=vmem, size = 0x12000, scoped, tag = 'internal scratch']
  #allocation2 [shape = 's32[1]{0}', space=sflag, size = 0x4, scoped, tag = 'scoped memory for to_rgb_forward.1']
  #allocation3 [shape = 'u8[512]{0}', space=smem, size = 0x200, scoped, tag = 'prefetched SMEM operand 0']
  #allocation4 [shape = 'u8[512]{0}', space=smem, size = 0x200, scoped, tag = 'prefetched SMEM operand 1']
  %s0 = inlined_call_operand.vmem [shape: f32[12], index: 0, kind: input, shape index: {}]
  %s1 = inlined_call_operand.vmem [shape: f32[3], index: 1, kind: input, shape index: {}]
  %s2 = inlined_call_operand.vmem [shape: f32[2,4,2,128], index: 2, kind: input, shape index: {}]
  %s3 = inlined_call_operand.vmem [shape: f32[2,3,2,128], index: 3, kind: output, shape index: {}]
  %s4 = sld [smem:[#allocation0]]
  $region37: #{to_rgb_forward.1} parent=0
    _
  %s6 = ssub.s32 1, %s4
  %s7 = scalar_select 0, %s6, %s4
  %s8 = sshll.u32 %s0, 4
  %s9 = int_to_ptr.vmem [resolvable:$true] %s8
  %11 = dma.vmem_to_smem %s9, 16, [#allocation3], [#allocation2]
  %s12 = sshll.u32 %s1, 4
  %s13 = int_to_ptr.vmem [resolvable:$true] %s12
  %15 = dma.vmem_to_smem %s13, 16, [#allocation4], [#allocation2]
  %16 = dma.done [#allocation2], 32
  %17 = sfence
  loop: start=0, step=1, limit=4
  $region2: #{to_rgb_forward.1} parent=0 // loop_pre_header
    _
  $region3: #{to_rgb_forward.1} parent=0 // loop_header
    %s19 = sphi 0, %s23
    %p20 = scmp.ge.s32.totalorder %s19, 4
    %s26 = sphi 0, %s38
    %s27 = sphi 0, %s34
    %s28 = sphi 0, %s26
    %s29 = sphi 0, %s27
    %s30 = sphi 0, %s28
    %s31 = sphi 0, %s29
    %s43 = sphi 0, %s45
    %s46 = sphi 0, %s43
    %s47 = sphi 0, %s46
    %s63 = sphi 0, %s47
    %s71 = sphi 0, %s73
    %s74 = sphi 0, %s71
    %s75 = sphi 0, %s74
    %s91 = sphi 0, %s75
  $region4: #{to_rgb_forward.1} parent=0 // loop_header_branch
    %22 = sbr.rel (%p20) target = $region8
  $region5: #{to_rgb_forward.1} parent=0 // loop_body
    %s24 = ssub.s32 %s19, 1
    %s25 = ssub.s32 %s19, 2
    %s32 = sadd.s32 1, %s27
    %p33 = scmp.ge.s32.totalorder %s32, 1
    %s34 = scalar_select %p33, 0, %s32
    %s35 = sadd.s32 1, %s26
    %s36 = scalar_select %p33, %s35, %s26
    %p37 = scmp.ge.s32.totalorder %s36, 2
    %s38 = scalar_select %p37, 0, %s36
    %s39 = ssub.s32 %s26, %s38
    %s40 = ssub.s32 %s27, %s34
    %s41 = sor.u32 %s39, %s40
    %p42 = scmp.eq.s32.totalorder %s41, 0
    %s44 = sadd.s32 %s43, 1
    %s45 = scalar_select %p42, %s43, %s44
    %p48 = pneg %p42
    %p49 = scmp.eq.s32.totalorder %s19, 1
    %p50 = por %p48, %p49
    %p51 = scmp.ne.s32.totalorder %s43, %s46
    %p52 = scmp.eq.s32.totalorder %s19, 0
    %p53 = por %p51, %p52
    %p54 = scmp.ne.s32.totalorder %s43, %s46
    %p55 = scmp.eq.s32.totalorder %s24, 1
    %p56 = por %p54, %p55
    %p57 = scmp.ne.s32.totalorder %s46, %s47
    %p58 = scmp.eq.s32.totalorder %s24, 0
    %p59 = por %p57, %p58
    %p60 = scmp.ne.s32.totalorder %s46, %s47
    %p61 = scmp.eq.s32.totalorder %s25, 1
    %p62 = por %p60, %p61
    %p64 = scmp.ne.s32.totalorder %s47, %s63
    %p65 = scmp.eq.s32.totalorder %s25, 0
    %p66 = por %p64, %p65
    %s67 = ssub.s32 %s26, %s38
    %s68 = ssub.s32 %s27, %s34
    %s69 = sor.u32 %s67, %s68
    %p70 = scmp.eq.s32.totalorder %s69, 0
    %s72 = sadd.s32 %s71, 1
    %s73 = scalar_select %p70, %s71, %s72
    %p76 = pneg %p70
    %p77 = scmp.eq.s32.totalorder %s19, 1
    %p78 = por %p76, %p77
    %p79 = scmp.ne.s32.totalorder %s71, %s74
    %p80 = scmp.eq.s32.totalorder %s19, 0
    %p81 = por %p79, %p80
    %p82 = scmp.ne.s32.totalorder %s71, %s74
    %p83 = scmp.eq.s32.totalorder %s24, 1
    %p84 = por %p82, %p83
    %p85 = scmp.ne.s32.totalorder %s74, %s75
    %p86 = scmp.eq.s32.totalorder %s24, 0
    %p87 = por %p85, %p86
    %p88 = scmp.ne.s32.totalorder %s74, %s75
    %p89 = scmp.eq.s32.totalorder %s25, 1
    %p90 = por %p88, %p89
    %p92 = scmp.ne.s32.totalorder %s75, %s91
    %p93 = scmp.eq.s32.totalorder %s25, 0
    %p94 = por %p92, %p93
    %p95 = scmp.le.s32.totalorder 1, %s19
    %p96 = scmp.lt.s32.totalorder %s19, 3
    %p97 = pnand %p95, %p96
    %p98 = pneg %p97
    // Predicated region
    $region9: #{to_rgb_forward.1} parent=5 // pred_check
      _
    $region10: #{to_rgb_forward.1} parent=5 // pred_check_branch
      %100 = sbr.rel (%p97) target = $region12
    $region11: #{to_rgb_forward.1} parent=5 // pred_region
      %s101 = ssub.s32 %s19, 1
    $region12: #{to_rgb_forward.1} parent=5 // pred_fallthru
      _
    %p102 = scmp.lt.s32.totalorder %s19, 2
    // Predicated region
    $region13: #{to_rgb_forward.1} parent=5 // pred_check
      %p103 = pneg %p102
    $region14: #{to_rgb_forward.1} parent=5 // pred_check_branch
      %105 = sbr.rel (%p103) target = $region16
    $region15: #{to_rgb_forward.1} parent=5 // pred_region
      // Predicated region
      $region17: #{to_rgb_forward.1} parent=15 // pred_check
        %p106 = pneg %p53
      $region18: #{to_rgb_forward.1} parent=15 // pred_check_branch
        %108 = sbr.rel (%p106) target = $region20
      $region19: #{to_rgb_forward.1} parent=15 // pred_region
        %p109 = scmp.lt.s32.totalorder %s26, 1
        %s110 = scalar_select %p109, %s26, 1
        %p111 = scmp.lt.s32.totalorder %s27, 0
        %s112 = scalar_select %p111, %s27, 0
        %s113 = smul.addr %s110, 4
        %s114 = sadd.s32 %s112, %s113
        %s115 = smul.addr %s114, 2
        %s116 = scalar_lea.vmem %s2, %s115
      $region20: #{to_rgb_forward.1} parent=15 // pred_fallthru
        _
    $region16: #{to_rgb_forward.1} parent=5 // pred_fallthru
      _
    %p117 = scmp.le.s32.totalorder 1, %s19
    %p118 = scmp.lt.s32.totalorder %s19, 3
    %p119 = pnand %p117, %p118
    %p120 = pneg %p119
    // Predicated region
    $region21: #{to_rgb_forward.1} parent=5 // pred_check
      _
    $region22: #{to_rgb_forward.1} parent=5 // pred_check_branch
      %122 = sbr.rel (%p119) target = $region24
    $region23: #{to_rgb_forward.1} parent=5 // pred_region
      %s123 = ssub.s32 %s19, 1
      %p124 = scmp.lt.s32.totalorder %s28, 1
      %s125 = scalar_select %p124, %s28, 1
      %p126 = scmp.lt.s32.totalorder %s29, 0
      %s127 = scalar_select %p126, %s29, 0
      %s128 = smul.addr %s125, 4
      %s129 = sadd.s32 %s127, %s128
      %s130 = smul.addr %s129, 2
      %s131 = scalar_lea.vmem %s2, %s130
      %p132 = pneg %p59
      %p133 = pneg %p56
      %p134 = pneg %p87
      %p135 = pneg %p84
      %p136 = scmp.lt.s32.totalorder %s28, 1
      %s137 = scalar_select %p136, %s28, 1
      %p138 = scmp.lt.s32.totalorder %s29, 0
      %s139 = scalar_select %p138, %s29, 0
      %s140 = smul.addr %s137, 3
      %s141 = sadd.s32 %s139, %s140
      %s142 = smul.addr %s141, 2
      %s143 = scalar_lea.vmem %s3, %s142
      %p144 = scmp.lt.s32.totalorder %s28, 1
      %s145 = scalar_select %p144, %s28, 1
      %p146 = scmp.lt.s32.totalorder %s29, 0
      %s147 = scalar_select %p146, %s29, 0
      %s148 = smul.addr %s145, 4
      %s149 = sadd.s32 %s147, %s148
      %s150 = smul.addr %s149, 2
      %s151 = scalar_lea.vmem %s2, %s150
      %p152 = scmp.lt.s32.totalorder %s28, 1
      %s153 = scalar_select %p152, %s28, 1
      %p154 = scmp.lt.s32.totalorder %s29, 0
      %s155 = scalar_select %p154, %s29, 0
      %s156 = smul.addr %s153, 3
      %s157 = sadd.s32 %s155, %s156
      %s158 = smul.addr %s157, 2
      %s159 = scalar_lea.vmem %s3, %s158
      %s160 = sld [smem:[#allocation3]]
      %s161 = sld [smem:[#allocation3 + $0x1]]
      %s162 = sld [smem:[#allocation3 + $0x2]]
      %s163 = sld [smem:[#allocation3 + $0x3]]
      %s164 = sld [smem:[#allocation3 + $0x4]]
      %s165 = sld [smem:[#allocation3 + $0x5]]
      %s166 = sld [smem:[#allocation3 + $0x6]]
      %s167 = sld [smem:[#allocation3 + $0x7]]
      %s168 = sld [smem:[#allocation3 + $0x8]]
      %s169 = sld [smem:[#allocation3 + $0x9]]
      %s170 = sld [smem:[#allocation3 + $0xa]]
      %s171 = sld [smem:[#allocation3 + $0xb]]
      %s172 = sld [smem:[#allocation4]]
      %s173 = sld [smem:[#allocation4 + $0x1]]
      %s174 = sld [smem:[#allocation4 + $0x2]]
      %v175 = vld [vmem:[%s151] sm:$0x3]
      %v176 = vstv %s160
      %v177 = vmul.f32 %v175, %v176
      %v178 = vstv %s161
      %v179 = vmul.f32 %v175, %v178
      %v180 = vstv %s162
      %v181 = vmul.f32 %v175, %v180
      %s182 = scalar_lea.vmem %s151, 2
      %v183 = vld [vmem:[%s182] sm:$0x3]
      %v184 = vstv %s163
      %v185 = vmul.f32 %v183, %v184
      %v186 = vadd.f32 %v177, %v185
      %v187 = vstv %s164
      %v188 = vmul.f32 %v183, %v187
      %v189 = vadd.f32 %v179, %v188
      %v190 = vstv %s165
      %v191 = vmul.f32 %v183, %v190
      %v192 = vadd.f32 %v181, %v191
      %s193 = scalar_lea.vmem %s151, 4
      %v194 = vld [vmem:[%s193] sm:$0x3]
      %v195 = vstv %s166
      %v196 = vmul.f32 %v194, %v195
      %v197 = vadd.f32 %v186, %v196
      %v198 = vstv %s167
      %v199 = vmul.f32 %v194, %v198
      %v200 = vadd.f32 %v189, %v199
      %v201 = vstv %s168
      %v202 = vmul.f32 %v194, %v201
      %v203 = vadd.f32 %v192, %v202
      %s204 = scalar_lea.vmem %s151, 6
      %v205 = vld [vmem:[%s204] sm:$0x3]
      %v206 = vstv %s169
      %v207 = vmul.f32 %v205, %v206
      %v208 = vadd.f32 %v197, %v207
      %v209 = vstv %s170
      %v210 = vmul.f32 %v205, %v209
      %v211 = vadd.f32 %v200, %v210
      %v212 = vstv %s171
      %v213 = vmul.f32 %v205, %v212
      %v214 = vadd.f32 %v203, %v213
      %v215 = vstv %s172
      %v216 = vadd.f32 %v208, %v215
      %v217 = vtanh.pop %v216
      %218 = vst [vmem:[%s159] sm:$0x3] %v217
      %v219 = vstv %s173
      %v220 = vadd.f32 %v211, %v219
      %v221 = vtanh.pop %v220
      %s222 = scalar_lea.vmem %s159, 2
      %223 = vst [vmem:[%s222] sm:$0x3] %v221
      %v224 = vstv %s174
      %v225 = vadd.f32 %v214, %v224
      %v226 = vtanh.pop %v225
      %s227 = scalar_lea.vmem %s159, 4
      %228 = vst [vmem:[%s227] sm:$0x3] %v226
      %p229 = scmp.lt.s32.totalorder %s28, 1
      %s230 = scalar_select %p229, %s28, 1
      %p231 = scmp.lt.s32.totalorder %s29, 0
      %s232 = scalar_select %p231, %s29, 0
      %s233 = smul.addr %s230, 3
      %s234 = sadd.s32 %s232, %s233
      %s235 = smul.addr %s234, 2
      %s236 = scalar_lea.vmem %s3, %s235
      // Predicated region
      $region25: #{to_rgb_forward.1} parent=23 // pred_check
        %p237 = pneg %p84
      $region26: #{to_rgb_forward.1} parent=23 // pred_check_branch
        %239 = sbr.rel (%p237) target = $region28
      $region27: #{to_rgb_forward.1} parent=23 // pred_region
        _
      $region28: #{to_rgb_forward.1} parent=23 // pred_fallthru
        _
    $region24: #{to_rgb_forward.1} parent=5 // pred_fallthru
      _
    %p240 = scmp.le.s32.totalorder 2, %s19
    // Predicated region
    $region29: #{to_rgb_forward.1} parent=5 // pred_check
      %p241 = pneg %p240
    $region30: #{to_rgb_forward.1} parent=5 // pred_check_branch
      %243 = sbr.rel (%p241) target = $region32
    $region31: #{to_rgb_forward.1} parent=5 // pred_region
      %s244 = ssub.s32 %s19, 2
      // Predicated region
      $region33: #{to_rgb_forward.1} parent=31 // pred_check
        %p245 = pneg %p90
      $region34: #{to_rgb_forward.1} parent=31 // pred_check_branch
        %247 = sbr.rel (%p245) target = $region36
      $region35: #{to_rgb_forward.1} parent=31 // pred_region
        %p248 = scmp.lt.s32.totalorder %s30, 1
        %s249 = scalar_select %p248, %s30, 1
        %p250 = scmp.lt.s32.totalorder %s31, 0
        %s251 = scalar_select %p250, %s31, 0
        %s252 = smul.addr %s249, 3
        %s253 = sadd.s32 %s251, %s252
        %s254 = smul.addr %s253, 2
        %s255 = scalar_lea.vmem %s3, %s254
      $region36: #{to_rgb_forward.1} parent=31 // pred_fallthru
        _
    $region32: #{to_rgb_forward.1} parent=5 // pred_fallthru
      _
  $region6: #{to_rgb_forward.1} parent=0 // loop_footer
    %s23 = sadd.s32 1, %s19
  $region7: #{to_rgb_forward.1} parent=0 // loop_footer_branch
    %18 = sbr.rel target = $region3
  $region8: #{to_rgb_forward.1} parent=0 // loop_exit
    _

</llo_original>
